<compile_context>
chip_gen: v7x
topology: tpu7x:2x2x1
jax: 0.10.0
libtpu: 0.0.40
codegen_flags: <defaults>
</compile_context>

<pallas_src>
import jax
import jax.numpy as jnp
from jax.experimental import pallas as pl
from jax.experimental.pallas import tpu as pltpu


def _make_graph_attention_kernel(num_views):
    M = num_views

    def kernel(*refs):
        w1t_ref, b1_ref, w2_ref = refs[0], refs[1], refs[2]
        z_refs = refs[3:3 + M]
        out_ref = refs[3 + M]

        w1t = w1t_ref[...]                               # (H, H), native dtype (MXU)
        b1 = b1_ref[...].astype(jnp.float32)             # (1, H)
        w2 = w2_ref[...].astype(jnp.float32)             # (1, H)

        # project: Linear -> Tanh -> Linear(1, bias=False), per view.
        zs = []
        logits = []
        for m in range(M):
            zm = z_refs[m][...]                          # (TB, H), native dtype
            zs.append(zm)
            hm = jnp.tanh(
                jnp.dot(zm, w1t, preferred_element_type=jnp.float32) + b1
            )                                            # (TB, H) f32
            # Linear(H, 1, bias=False) as VPU multiply + lane reduce.
            logits.append(jnp.sum(hm * w2, axis=-1, keepdims=True))   # (TB, 1)

        # softmax over the view axis (dim=1 in the PyTorch module), per batch row.
        m_max = logits[0]
        for m in range(1, M):
            m_max = jnp.maximum(m_max, logits[m])
        exps = [jnp.exp(l - m_max) for l in logits]      # each (TB, 1)
        denom = exps[0]
        for m in range(1, M):
            denom = denom + exps[m]
        inv = pl.reciprocal(denom, approx=True)          # (TB, 1), EUP vrcp

        # weighted sum over views: sum_m beta_m * z_m, on the VPU.
        acc = (exps[0] * inv) * zs[0].astype(jnp.float32)
        for m in range(1, M):
            acc = acc + (exps[m] * inv) * zs[m].astype(jnp.float32)

        out_ref[...] = acc.astype(out_ref.dtype)

    return kernel


def _round_up(x, n):
    return ((x + n - 1) // n) * n


def _choose_block_b(batch, num_views, hidden, bytes_per_elem=4,
                    vmem_budget_bytes=16 * 1024 * 1024):
    """Largest batch block (multiple of 8, capped) keeping double-buffered inputs
    plus the output comfortably inside VMEM on all generations (incl. v7x)."""
    per_row_bytes = 2 * (num_views + 1) * hidden * bytes_per_elem    # 2x: double buffering
    tb = vmem_budget_bytes // max(per_row_bytes, 1)
    tb = max(8, min(1024, (tb // 8) * 8))
    if batch <= tb:                      # small batch: single block, padded to sublanes
        tb = _round_up(max(batch, 1), 8)
    return tb


def graph_attention(z_list, w1, b1, w2, *, block_b=None):
    """z_list: list of M arrays of shape (B, H).
    w1: (H, H) PyTorch (out, in) layout; b1: (H,); w2: (1, H) (no bias).
    Returns (B, H): softmax-over-views weighted sum of the stacked views."""
    M = len(z_list)
    B, H = z_list[0].shape
    dtype = z_list[0].dtype

    if block_b is None:
        block_b = _choose_block_b(B, M, H, jnp.dtype(dtype).itemsize)
    num_blocks = pl.cdiv(B, block_b)
    Bp = num_blocks * block_b

    # Pad the batch axis once in the wrapper (padded rows are sliced off below).
    if Bp != B:
        z_list = [jnp.pad(z, ((0, Bp - B), (0, 0))) for z in z_list]

    w1t = w1.T                           # hoist the weight transpose out of the kernel
    b1_row = b1.reshape(1, H)
    w2_row = w2.reshape(1, H)

    weight_specs = [
        pl.BlockSpec((H, H), lambda b: (0, 0)),
        pl.BlockSpec((1, H), lambda b: (0, 0)),
        pl.BlockSpec((1, H), lambda b: (0, 0)),
    ]
    z_specs = [pl.BlockSpec((block_b, H), lambda b: (b, 0)) for _ in range(M)]

    out = pl.pallas_call(
        _make_graph_attention_kernel(M),
        out_shape=jax.ShapeDtypeStruct((Bp, H), dtype),
        grid_spec=pltpu.PrefetchScalarGridSpec(
            num_scalar_prefetch=0,
            grid=(num_blocks,),
            in_specs=weight_specs + z_specs,
            out_specs=pl.BlockSpec((block_b, H), lambda b: (b, 0)),
        ),
        compiler_params=pltpu.CompilerParams(
            dimension_semantics=("parallel",),
        ),
    )(w1t, b1_row, w2_row, *z_list)

    return out[:B] if Bp != B else out


def _reference(z_list, w1, b1, w2):
    z = jnp.stack(z_list, axis=1)                              # (B, M, H)
    h = jnp.tanh(jnp.einsum("bmh,oh->bmo", z, w1) + b1)        # (B, M, H)
    w = jnp.einsum("bmh,oh->bmo", h, w2)                       # (B, M, 1)
    beta = jax.nn.softmax(w, axis=1)
    return (beta * z).sum(axis=1)                              # (B, H)


if __name__ == "__main__":
    B, M, H = 2, 8, 32                # batch, number of stacked views, hidden_size
    key = jax.random.PRNGKey(0)
    k_z, k_w1, k_b1, k_w2 = jax.random.split(key, 4)

    # deterministic init (shapes match nn.Linear(H, H) and nn.Linear(H, 1, bias=False))
    bound1 = 1.0 / jnp.sqrt(H)
    w1 = jax.random.uniform(k_w1, (H, H), jnp.float32, -bound1, bound1)
    b1 = jax.random.uniform(k_b1, (H,), jnp.float32, -bound1, bound1)
    w2 = jax.random.uniform(k_w2, (1, H), jnp.float32, -bound1, bound1)

    z_list = [
        jax.random.normal(jax.random.fold_in(k_z, m), (B, H), jnp.float32)
        for m in range(M)
    ]

    out = graph_attention(z_list, w1, b1, w2)
    out = jax.block_until_ready(out)

    ref = _reference(z_list, w1, b1, w2)
    assert out.shape == (B, H)
    assert jnp.allclose(out, ref, atol=1e-3, rtol=1e-3), "mismatch vs reference"

    print("KERNEL_OK")
</pallas_src>

<mosaic_0001>
module attributes {stable_mosaic.version = 11 : i64} {
  func.func @kernel(%arg0: i32, %arg1: memref<32x32xf32, #tpu.memory_space<vmem>>, %arg2: memref<1x32xf32, #tpu.memory_space<vmem>>, %arg3: memref<1x32xf32, #tpu.memory_space<vmem>>, %arg4: memref<8x32xf32, #tpu.memory_space<vmem>>, %arg5: memref<8x32xf32, #tpu.memory_space<vmem>>, %arg6: memref<8x32xf32, #tpu.memory_space<vmem>>, %arg7: memref<8x32xf32, #tpu.memory_space<vmem>>, %arg8: memref<8x32xf32, #tpu.memory_space<vmem>>, %arg9: memref<8x32xf32, #tpu.memory_space<vmem>>, %arg10: memref<8x32xf32, #tpu.memory_space<vmem>>, %arg11: memref<8x32xf32, #tpu.memory_space<vmem>>, %arg12: memref<8x32xf32, #tpu.memory_space<vmem>>) attributes {dimension_semantics = [#tpu.dimension_semantics<parallel>], iteration_bounds = array<i64: 1>, scalar_prefetch = 0 : i64, scratch_operands = 0 : i64, tpu.core_type = #tpu.core_type<tc>, window_params = [{pipeline_mode = #tpu.pipeline_mode<synchronous>, transform_indices = @transform_0, window_bounds = array<i64: 32, 32>}, {pipeline_mode = #tpu.pipeline_mode<synchronous>, transform_indices = @transform_1, window_bounds = array<i64: 1, 32>}, {pipeline_mode = #tpu.pipeline_mode<synchronous>, transform_indices = @transform_2, window_bounds = array<i64: 1, 32>}, {transform_indices = @transform_3, window_bounds = array<i64: 8, 32>}, {transform_indices = @transform_4, window_bounds = array<i64: 8, 32>}, {transform_indices = @transform_5, window_bounds = array<i64: 8, 32>}, {transform_indices = @transform_6, window_bounds = array<i64: 8, 32>}, {transform_indices = @transform_7, window_bounds = array<i64: 8, 32>}, {transform_indices = @transform_8, window_bounds = array<i64: 8, 32>}, {transform_indices = @transform_9, window_bounds = array<i64: 8, 32>}, {transform_indices = @transform_10, window_bounds = array<i64: 8, 32>}, {transform_indices = @transform_11, window_bounds = array<i64: 8, 32>}]} {
    %c0 = arith.constant 0 : index
    %c0_0 = arith.constant 0 : index
    %0 = vector.load %arg1[%c0, %c0_0] : memref<32x32xf32, #tpu.memory_space<vmem>>, vector<32x32xf32>
    %c0_1 = arith.constant 0 : index
    %c0_2 = arith.constant 0 : index
    %1 = vector.load %arg2[%c0_1, %c0_2] : memref<1x32xf32, #tpu.memory_space<vmem>>, vector<1x32xf32>
    %c0_3 = arith.constant 0 : index
    %c0_4 = arith.constant 0 : index
    %2 = vector.load %arg3[%c0_3, %c0_4] : memref<1x32xf32, #tpu.memory_space<vmem>>, vector<1x32xf32>
    %c0_5 = arith.constant 0 : index
    %c0_6 = arith.constant 0 : index
    %3 = vector.load %arg4[%c0_5, %c0_6] : memref<8x32xf32, #tpu.memory_space<vmem>>, vector<8x32xf32>
    %cst = arith.constant dense<0.000000e+00> : vector<8x32xf32>
    %4 = tpu.matmul %3, %0, %cst {dimension_numbers = #tpu.dot_dimension_numbers<[1], [0], [0], [1], [0, 0, 1, 1], [], []>} : vector<8x32xf32>, vector<32x32xf32>, vector<8x32xf32> -> vector<8x32xf32>
    %5 = vector.broadcast %1 : vector<1x32xf32> to vector<8x32xf32>
    %6 = arith.addf %4, %5 : vector<8x32xf32>
    %7 = math.tanh %6 : vector<8x32xf32>
    %8 = vector.broadcast %2 : vector<1x32xf32> to vector<8x32xf32>
    %9 = arith.mulf %7, %8 : vector<8x32xf32>
    %cst_7 = arith.constant dense<0.000000e+00> : vector<8xf32>
    %10 = vector.multi_reduction <add>, %9, %cst_7 [1] : vector<8x32xf32> to vector<8xf32>
    %11 = vector.shape_cast %10 : vector<8xf32> to vector<8x1xf32>
    %c0_8 = arith.constant 0 : index
    %c0_9 = arith.constant 0 : index
    %12 = vector.load %arg5[%c0_8, %c0_9] : memref<8x32xf32, #tpu.memory_space<vmem>>, vector<8x32xf32>
    %cst_10 = arith.constant dense<0.000000e+00> : vector<8x32xf32>
    %13 = tpu.matmul %12, %0, %cst_10 {dimension_numbers = #tpu.dot_dimension_numbers<[1], [0], [0], [1], [0, 0, 1, 1], [], []>} : vector<8x32xf32>, vector<32x32xf32>, vector<8x32xf32> -> vector<8x32xf32>
    %14 = vector.broadcast %1 : vector<1x32xf32> to vector<8x32xf32>
    %15 = arith.addf %13, %14 : vector<8x32xf32>
    %16 = math.tanh %15 : vector<8x32xf32>
    %17 = vector.broadcast %2 : vector<1x32xf32> to vector<8x32xf32>
    %18 = arith.mulf %16, %17 : vector<8x32xf32>
    %cst_11 = arith.constant dense<0.000000e+00> : vector<8xf32>
    %19 = vector.multi_reduction <add>, %18, %cst_11 [1] : vector<8x32xf32> to vector<8xf32>
    %20 = vector.shape_cast %19 : vector<8xf32> to vector<8x1xf32>
    %c0_12 = arith.constant 0 : index
    %c0_13 = arith.constant 0 : index
    %21 = vector.load %arg6[%c0_12, %c0_13] : memref<8x32xf32, #tpu.memory_space<vmem>>, vector<8x32xf32>
    %cst_14 = arith.constant dense<0.000000e+00> : vector<8x32xf32>
    %22 = tpu.matmul %21, %0, %cst_14 {dimension_numbers = #tpu.dot_dimension_numbers<[1], [0], [0], [1], [0, 0, 1, 1], [], []>} : vector<8x32xf32>, vector<32x32xf32>, vector<8x32xf32> -> vector<8x32xf32>
    %23 = vector.broadcast %1 : vector<1x32xf32> to vector<8x32xf32>
    %24 = arith.addf %22, %23 : vector<8x32xf32>
    %25 = math.tanh %24 : vector<8x32xf32>
    %26 = vector.broadcast %2 : vector<1x32xf32> to vector<8x32xf32>
    %27 = arith.mulf %25, %26 : vector<8x32xf32>
    %cst_15 = arith.constant dense<0.000000e+00> : vector<8xf32>
    %28 = vector.multi_reduction <add>, %27, %cst_15 [1] : vector<8x32xf32> to vector<8xf32>
    %29 = vector.shape_cast %28 : vector<8xf32> to vector<8x1xf32>
    %c0_16 = arith.constant 0 : index
    %c0_17 = arith.constant 0 : index
    %30 = vector.load %arg7[%c0_16, %c0_17] : memref<8x32xf32, #tpu.memory_space<vmem>>, vector<8x32xf32>
    %cst_18 = arith.constant dense<0.000000e+00> : vector<8x32xf32>
    %31 = tpu.matmul %30, %0, %cst_18 {dimension_numbers = #tpu.dot_dimension_numbers<[1], [0], [0], [1], [0, 0, 1, 1], [], []>} : vector<8x32xf32>, vector<32x32xf32>, vector<8x32xf32> -> vector<8x32xf32>
    %32 = vector.broadcast %1 : vector<1x32xf32> to vector<8x32xf32>
    %33 = arith.addf %31, %32 : vector<8x32xf32>
    %34 = math.tanh %33 : vector<8x32xf32>
    %35 = vector.broadcast %2 : vector<1x32xf32> to vector<8x32xf32>
    %36 = arith.mulf %34, %35 : vector<8x32xf32>
    %cst_19 = arith.constant dense<0.000000e+00> : vector<8xf32>
    %37 = vector.multi_reduction <add>, %36, %cst_19 [1] : vector<8x32xf32> to vector<8xf32>
    %38 = vector.shape_cast %37 : vector<8xf32> to vector<8x1xf32>
    %c0_20 = arith.constant 0 : index
    %c0_21 = arith.constant 0 : index
    %39 = vector.load %arg8[%c0_20, %c0_21] : memref<8x32xf32, #tpu.memory_space<vmem>>, vector<8x32xf32>
    %cst_22 = arith.constant dense<0.000000e+00> : vector<8x32xf32>
    %40 = tpu.matmul %39, %0, %cst_22 {dimension_numbers = #tpu.dot_dimension_numbers<[1], [0], [0], [1], [0, 0, 1, 1], [], []>} : vector<8x32xf32>, vector<32x32xf32>, vector<8x32xf32> -> vector<8x32xf32>
    %41 = vector.broadcast %1 : vector<1x32xf32> to vector<8x32xf32>
    %42 = arith.addf %40, %41 : vector<8x32xf32>
    %43 = math.tanh %42 : vector<8x32xf32>
    %44 = vector.broadcast %2 : vector<1x32xf32> to vector<8x32xf32>
    %45 = arith.mulf %43, %44 : vector<8x32xf32>
    %cst_23 = arith.constant dense<0.000000e+00> : vector<8xf32>
    %46 = vector.multi_reduction <add>, %45, %cst_23 [1] : vector<8x32xf32> to vector<8xf32>
    %47 = vector.shape_cast %46 : vector<8xf32> to vector<8x1xf32>
    %c0_24 = arith.constant 0 : index
    %c0_25 = arith.constant 0 : index
    %48 = vector.load %arg9[%c0_24, %c0_25] : memref<8x32xf32, #tpu.memory_space<vmem>>, vector<8x32xf32>
    %cst_26 = arith.constant dense<0.000000e+00> : vector<8x32xf32>
    %49 = tpu.matmul %48, %0, %cst_26 {dimension_numbers = #tpu.dot_dimension_numbers<[1], [0], [0], [1], [0, 0, 1, 1], [], []>} : vector<8x32xf32>, vector<32x32xf32>, vector<8x32xf32> -> vector<8x32xf32>
    %50 = vector.broadcast %1 : vector<1x32xf32> to vector<8x32xf32>
    %51 = arith.addf %49, %50 : vector<8x32xf32>
    %52 = math.tanh %51 : vector<8x32xf32>
    %53 = vector.broadcast %2 : vector<1x32xf32> to vector<8x32xf32>
    %54 = arith.mulf %52, %53 : vector<8x32xf32>
    %cst_27 = arith.constant dense<0.000000e+00> : vector<8xf32>
    %55 = vector.multi_reduction <add>, %54, %cst_27 [1] : vector<8x32xf32> to vector<8xf32>
    %56 = vector.shape_cast %55 : vector<8xf32> to vector<8x1xf32>
    %c0_28 = arith.constant 0 : index
    %c0_29 = arith.constant 0 : index
    %57 = vector.load %arg10[%c0_28, %c0_29] : memref<8x32xf32, #tpu.memory_space<vmem>>, vector<8x32xf32>
    %cst_30 = arith.constant dense<0.000000e+00> : vector<8x32xf32>
    %58 = tpu.matmul %57, %0, %cst_30 {dimension_numbers = #tpu.dot_dimension_numbers<[1], [0], [0], [1], [0, 0, 1, 1], [], []>} : vector<8x32xf32>, vector<32x32xf32>, vector<8x32xf32> -> vector<8x32xf32>
    %59 = vector.broadcast %1 : vector<1x32xf32> to vector<8x32xf32>
    %60 = arith.addf %58, %59 : vector<8x32xf32>
    %61 = math.tanh %60 : vector<8x32xf32>
    %62 = vector.broadcast %2 : vector<1x32xf32> to vector<8x32xf32>
    %63 = arith.mulf %61, %62 : vector<8x32xf32>
    %cst_31 = arith.constant dense<0.000000e+00> : vector<8xf32>
    %64 = vector.multi_reduction <add>, %63, %cst_31 [1] : vector<8x32xf32> to vector<8xf32>
    %65 = vector.shape_cast %64 : vector<8xf32> to vector<8x1xf32>
    %c0_32 = arith.constant 0 : index
    %c0_33 = arith.constant 0 : index
    %66 = vector.load %arg11[%c0_32, %c0_33] : memref<8x32xf32, #tpu.memory_space<vmem>>, vector<8x32xf32>
    %cst_34 = arith.constant dense<0.000000e+00> : vector<8x32xf32>
    %67 = tpu.matmul %66, %0, %cst_34 {dimension_numbers = #tpu.dot_dimension_numbers<[1], [0], [0], [1], [0, 0, 1, 1], [], []>} : vector<8x32xf32>, vector<32x32xf32>, vector<8x32xf32> -> vector<8x32xf32>
    %68 = vector.broadcast %1 : vector<1x32xf32> to vector<8x32xf32>
    %69 = arith.addf %67, %68 : vector<8x32xf32>
    %70 = math.tanh %69 : vector<8x32xf32>
    %71 = vector.broadcast %2 : vector<1x32xf32> to vector<8x32xf32>
    %72 = arith.mulf %70, %71 : vector<8x32xf32>
    %cst_35 = arith.constant dense<0.000000e+00> : vector<8xf32>
    %73 = vector.multi_reduction <add>, %72, %cst_35 [1] : vector<8x32xf32> to vector<8xf32>
    %74 = vector.shape_cast %73 : vector<8xf32> to vector<8x1xf32>
    %75 = arith.maximumf %11, %20 : vector<8x1xf32>
    %76 = arith.maximumf %75, %29 : vector<8x1xf32>
    %77 = arith.maximumf %76, %38 : vector<8x1xf32>
    %78 = arith.maximumf %77, %47 : vector<8x1xf32>
    %79 = arith.maximumf %78, %56 : vector<8x1xf32>
    %80 = arith.maximumf %79, %65 : vector<8x1xf32>
    %81 = arith.maximumf %80, %74 : vector<8x1xf32>
    %82 = arith.subf %11, %81 : vector<8x1xf32>
    %83 = math.exp %82 : vector<8x1xf32>
    %84 = arith.subf %20, %81 : vector<8x1xf32>
    %85 = math.exp %84 : vector<8x1xf32>
    %86 = arith.subf %29, %81 : vector<8x1xf32>
    %87 = math.exp %86 : vector<8x1xf32>
    %88 = arith.subf %38, %81 : vector<8x1xf32>
    %89 = math.exp %88 : vector<8x1xf32>
    %90 = arith.subf %47, %81 : vector<8x1xf32>
    %91 = math.exp %90 : vector<8x1xf32>
    %92 = arith.subf %56, %81 : vector<8x1xf32>
    %93 = math.exp %92 : vector<8x1xf32>
    %94 = arith.subf %65, %81 : vector<8x1xf32>
    %95 = math.exp %94 : vector<8x1xf32>
    %96 = arith.subf %74, %81 : vector<8x1xf32>
    %97 = math.exp %96 : vector<8x1xf32>
    %98 = arith.addf %83, %85 : vector<8x1xf32>
    %99 = arith.addf %98, %87 : vector<8x1xf32>
    %100 = arith.addf %99, %89 : vector<8x1xf32>
    %101 = arith.addf %100, %91 : vector<8x1xf32>
    %102 = arith.addf %101, %93 : vector<8x1xf32>
    %103 = arith.addf %102, %95 : vector<8x1xf32>
    %104 = arith.addf %103, %97 : vector<8x1xf32>
    %105 = tpu.reciprocal %104 {approx = true} : vector<8x1xf32> -> vector<8x1xf32>
    %106 = arith.mulf %83, %105 : vector<8x1xf32>
    %107 = vector.broadcast %106 : vector<8x1xf32> to vector<8x32xf32>
    %108 = arith.mulf %107, %3 : vector<8x32xf32>
    %109 = arith.mulf %85, %105 : vector<8x1xf32>
    %110 = vector.broadcast %109 : vector<8x1xf32> to vector<8x32xf32>
    %111 = arith.mulf %110, %12 : vector<8x32xf32>
    %112 = arith.addf %108, %111 : vector<8x32xf32>
    %113 = arith.mulf %87, %105 : vector<8x1xf32>
    %114 = vector.broadcast %113 : vector<8x1xf32> to vector<8x32xf32>
    %115 = arith.mulf %114, %21 : vector<8x32xf32>
    %116 = arith.addf %112, %115 : vector<8x32xf32>
    %117 = arith.mulf %89, %105 : vector<8x1xf32>
    %118 = vector.broadcast %117 : vector<8x1xf32> to vector<8x32xf32>
    %119 = arith.mulf %118, %30 : vector<8x32xf32>
    %120 = arith.addf %116, %119 : vector<8x32xf32>
    %121 = arith.mulf %91, %105 : vector<8x1xf32>
    %122 = vector.broadcast %121 : vector<8x1xf32> to vector<8x32xf32>
    %123 = arith.mulf %122, %39 : vector<8x32xf32>
    %124 = arith.addf %120, %123 : vector<8x32xf32>
    %125 = arith.mulf %93, %105 : vector<8x1xf32>
    %126 = vector.broadcast %125 : vector<8x1xf32> to vector<8x32xf32>
    %127 = arith.mulf %126, %48 : vector<8x32xf32>
    %128 = arith.addf %124, %127 : vector<8x32xf32>
    %129 = arith.mulf %95, %105 : vector<8x1xf32>
    %130 = vector.broadcast %129 : vector<8x1xf32> to vector<8x32xf32>
    %131 = arith.mulf %130, %57 : vector<8x32xf32>
    %132 = arith.addf %128, %131 : vector<8x32xf32>
    %133 = arith.mulf %97, %105 : vector<8x1xf32>
    %134 = vector.broadcast %133 : vector<8x1xf32> to vector<8x32xf32>
    %135 = arith.mulf %134, %66 : vector<8x32xf32>
    %136 = arith.addf %132, %135 : vector<8x32xf32>
    %c0_36 = arith.constant 0 : index
    %c0_37 = arith.constant 0 : index
    %137 = vector.load %arg12[%c0_36, %c0_37] : memref<8x32xf32, #tpu.memory_space<vmem>>, vector<8x32xf32>
    tpu.vector_store %arg12[%c0_36, %c0_37], %136 {strides = array<i32>} : memref<8x32xf32, #tpu.memory_space<vmem>>, vector<8x32xf32>,
    return
  }
  func.func @transform_0(%arg0: i32) -> (i32, i32) {
    %c0_i32 = arith.constant 0 : i32
    %c0_i32_0 = arith.constant 0 : i32
    %c0_i32_1 = arith.constant 0 : i32
    return %c0_i32, %c0_i32_0 : i32, i32
  }
  func.func @transform_1(%arg0: i32) -> (i32, i32) {
    %c0_i32 = arith.constant 0 : i32
    %c0_i32_0 = arith.constant 0 : i32
    %c0_i32_1 = arith.constant 0 : i32
    return %c0_i32, %c0_i32_0 : i32, i32
  }
  func.func @transform_2(%arg0: i32) -> (i32, i32) {
    %c0_i32 = arith.constant 0 : i32
    %c0_i32_0 = arith.constant 0 : i32
    %c0_i32_1 = arith.constant 0 : i32
    return %c0_i32, %c0_i32_0 : i32, i32
  }
  func.func @transform_3(%arg0: i32) -> (i32, i32) {
    %c0_i32 = arith.constant 0 : i32
    %c0_i32_0 = arith.constant 0 : i32
    return %arg0, %c0_i32 : i32, i32
  }
  func.func @transform_4(%arg0: i32) -> (i32, i32) {
    %c0_i32 = arith.constant 0 : i32
    %c0_i32_0 = arith.constant 0 : i32
    return %arg0, %c0_i32 : i32, i32
  }
  func.func @transform_5(%arg0: i32) -> (i32, i32) {
    %c0_i32 = arith.constant 0 : i32
    %c0_i32_0 = arith.constant 0 : i32
    return %arg0, %c0_i32 : i32, i32
  }
  func.func @transform_6(%arg0: i32) -> (i32, i32) {
    %c0_i32 = arith.constant 0 : i32
    %c0_i32_0 = arith.constant 0 : i32
    return %arg0, %c0_i32 : i32, i32
  }
  func.func @transform_7(%arg0: i32) -> (i32, i32) {
    %c0_i32 = arith.constant 0 : i32
    %c0_i32_0 = arith.constant 0 : i32
    return %arg0, %c0_i32 : i32, i32
  }
  func.func @transform_8(%arg0: i32) -> (i32, i32) {
    %c0_i32 = arith.constant 0 : i32
    %c0_i32_0 = arith.constant 0 : i32
    return %arg0, %c0_i32 : i32, i32
  }
  func.func @transform_9(%arg0: i32) -> (i32, i32) {
    %c0_i32 = arith.constant 0 : i32
    %c0_i32_0 = arith.constant 0 : i32
    return %arg0, %c0_i32 : i32, i32
  }
  func.func @transform_10(%arg0: i32) -> (i32, i32) {
    %c0_i32 = arith.constant 0 : i32
    %c0_i32_0 = arith.constant 0 : i32
    return %arg0, %c0_i32 : i32, i32
  }
  func.func @transform_11(%arg0: i32) -> (i32, i32) {
    %c0_i32 = arith.constant 0 : i32
    %c0_i32_0 = arith.constant 0 : i32
    return %arg0, %c0_i32 : i32, i32
  }
}

</mosaic_0001>

<llo_original>
// kernel: tpu_custom_call.1
$region0: #{tpu_custom_call.1}
  #allocation0 [shape = 'u32[]', space=smem, size = 0x4, offset = 0x4, fixed_abs, tag = 'smem constant byte address 0x4 - core index']
  #allocation1 [shape = 'u32[144,128]{1,0:T(1,128)}', space=vmem, size = 0x12000, scoped, tag = 'internal scratch']
  %s0 = inlined_call_operand.hbm [shape: f32[32,32], index: 0, kind: input, shape index: {}]
  %s1 = inlined_call_operand.vmem [shape: f32[1,32], index: 1, kind: input, shape index: {}]
  %s2 = inlined_call_operand.vmem [shape: f32[1,32], index: 2, kind: input, shape index: {}]
  %s3 = inlined_call_operand.vmem [shape: f32[8,32], index: 3, kind: input, shape index: {}]
  %s4 = inlined_call_operand.hbm [shape: f32[8,32], index: 4, kind: input, shape index: {}]
  %s5 = inlined_call_operand.vmem [shape: f32[8,32], index: 5, kind: input, shape index: {}]
  %s6 = inlined_call_operand.hbm [shape: f32[8,32], index: 6, kind: input, shape index: {}]
  %s7 = inlined_call_operand.vmem [shape: f32[8,32], index: 7, kind: input, shape index: {}]
  %s8 = inlined_call_operand.hbm [shape: f32[8,32], index: 8, kind: input, shape index: {}]
  %s9 = inlined_call_operand.vmem [shape: f32[8,32], index: 9, kind: input, shape index: {}]
  %s10 = inlined_call_operand.hbm [shape: f32[8,32], index: 10, kind: input, shape index: {}]
  %s11 = inlined_call_operand.hbm [shape: f32[8,32], index: 11, kind: output, shape index: {}]
  %s12 = sld [smem:[#allocation0]]
  $region74: #{tpu_custom_call.1} parent=0
    _
  %s14 = ssub.s32 1, %s12
  %s15 = scalar_select 0, %s14, %s12
  $region1: #{tpu_custom_call.1} parent=0
    #allocation2 [shape = 'u8[16384]{0}', space=vmem, size = 0x4000, scoped, tag = 'input window, operand 0, single buffered']
    #allocation3 [shape = 's32[1]{0}', space=sflag, size = 0x4, scoped, tag = 'scoped memory for tpu_custom_call.1']
    #allocation4 [shape = 's32[1]{0}', space=sflag, size = 0x4, scoped, tag = 'scoped memory for tpu_custom_call.1']
    #allocation5 [shape = 'u8[4096]{0}', space=vmem, size = 0x1000, scoped, tag = 'input window, operand 4, single buffered']
    #allocation6 [shape = 's32[1]{0}', space=sflag, size = 0x4, scoped, tag = 'scoped memory for tpu_custom_call.1']
    #allocation7 [shape = 'u8[4096]{0}', space=vmem, size = 0x1000, scoped, tag = 'input window, operand 6, single buffered']
    #allocation8 [shape = 'u8[4096]{0}', space=vmem, size = 0x1000, scoped, tag = 'input window, operand 8, single buffered']
    #allocation9 [shape = 's32[1]{0}', space=sflag, size = 0x4, scoped, tag = 'scoped memory for tpu_custom_call.1']
    #allocation10 [shape = 'u8[4096]{0}', space=vmem, size = 0x1000, scoped, tag = 'input window, operand 10, single buffered']
    #allocation11 [shape = 'u8[4096]{0}', space=vmem, size = 0x1000, scoped, tag = 'output window, operand 0, single buffered']
    %16 = vsyncpa [#allocation3], 0
    %17 = vsyncpa [#allocation6], 0
    %18 = vsyncpa [#allocation9], 0
    %19 = vsyncpa [#allocation4], 0
    // Predicated region
    $region2: #{tpu_custom_call.1} parent=1 // pred_check
      _
    $region3: #{tpu_custom_call.1} parent=1 // pred_check_branch
      %21 = sbr.rel (0) target = $region5
    $region4: #{tpu_custom_call.1} parent=1 // pred_region
      %s23 = ssub.s32 512, 512
      %24 = vsyncadd [#allocation3], %s23
      %s25 = sshll.u32 [#allocation2], 4
      %s26 = int_to_ptr.vmem [resolvable:$true] %s25
      %31 = dma.hbm_to_vmem [thread:$0]  %s0, 512, %s26, [#allocation3], 128, 128, 8
    $region5: #{tpu_custom_call.1} parent=1 // pred_fallthru
      _
    // Predicated region
    $region6: #{tpu_custom_call.1} parent=1 // pred_check
      _
    $region7: #{tpu_custom_call.1} parent=1 // pred_check_branch
      %33 = sbr.rel (0) target = $region9
    $region8: #{tpu_custom_call.1} parent=1 // pred_region
      _
    $region9: #{tpu_custom_call.1} parent=1 // pred_fallthru
      _
    // Predicated region
    $region10: #{tpu_custom_call.1} parent=1 // pred_check
      _
    $region11: #{tpu_custom_call.1} parent=1 // pred_check_branch
      %35 = sbr.rel (0) target = $region13
    $region12: #{tpu_custom_call.1} parent=1 // pred_region
      _
    $region13: #{tpu_custom_call.1} parent=1 // pred_fallthru
      _
    // Predicated region
    $region14: #{tpu_custom_call.1} parent=1 // pred_check
      _
    $region15: #{tpu_custom_call.1} parent=1 // pred_check_branch
      %37 = sbr.rel (0) target = $region17
    $region16: #{tpu_custom_call.1} parent=1 // pred_region
      _
    $region17: #{tpu_custom_call.1} parent=1 // pred_fallthru
      _
    // Predicated region
    $region18: #{tpu_custom_call.1} parent=1 // pred_check
      _
    $region19: #{tpu_custom_call.1} parent=1 // pred_check_branch
      %39 = sbr.rel (0) target = $region21
    $region20: #{tpu_custom_call.1} parent=1 // pred_region
      %s41 = ssub.s32 128, 128
      %42 = vsyncadd [#allocation6], %s41
      %s44 = sshll.u32 [#allocation5], 4
      %s45 = int_to_ptr.vmem [resolvable:$true] %s44
      %47 = dma.hbm_to_vmem [thread:$0]  %s4, 128, %s45, [#allocation6]
    $region21: #{tpu_custom_call.1} parent=1 // pred_fallthru
      _
    // Predicated region
    $region22: #{tpu_custom_call.1} parent=1 // pred_check
      _
    $region23: #{tpu_custom_call.1} parent=1 // pred_check_branch
      %49 = sbr.rel (0) target = $region25
    $region24: #{tpu_custom_call.1} parent=1 // pred_region
      _
    $region25: #{tpu_custom_call.1} parent=1 // pred_fallthru
      _
    // Predicated region
    $region26: #{tpu_custom_call.1} parent=1 // pred_check
      _
    $region27: #{tpu_custom_call.1} parent=1 // pred_check_branch
      %51 = sbr.rel (0) target = $region29
    $region28: #{tpu_custom_call.1} parent=1 // pred_region
      %s53 = ssub.s32 128, 128
      %54 = vsyncadd [#allocation6], %s53
      %s56 = sshll.u32 [#allocation7], 4
      %s57 = int_to_ptr.vmem [resolvable:$true] %s56
      %59 = dma.hbm_to_vmem [thread:$0]  %s6, 128, %s57, [#allocation6]
    $region29: #{tpu_custom_call.1} parent=1 // pred_fallthru
      _
    // Predicated region
    $region30: #{tpu_custom_call.1} parent=1 // pred_check
      _
    $region31: #{tpu_custom_call.1} parent=1 // pred_check_branch
      %61 = sbr.rel (0) target = $region33
    $region32: #{tpu_custom_call.1} parent=1 // pred_region
      _
    $region33: #{tpu_custom_call.1} parent=1 // pred_fallthru
      _
    // Predicated region
    $region34: #{tpu_custom_call.1} parent=1 // pred_check
      _
    $region35: #{tpu_custom_call.1} parent=1 // pred_check_branch
      %63 = sbr.rel (0) target = $region37
    $region36: #{tpu_custom_call.1} parent=1 // pred_region
      %s65 = ssub.s32 128, 128
      %66 = vsyncadd [#allocation9], %s65
      %s68 = sshll.u32 [#allocation8], 4
      %s69 = int_to_ptr.vmem [resolvable:$true] %s68
      %71 = dma.hbm_to_vmem [thread:$0]  %s8, 128, %s69, [#allocation9]
    $region37: #{tpu_custom_call.1} parent=1 // pred_fallthru
      _
    // Predicated region
    $region38: #{tpu_custom_call.1} parent=1 // pred_check
      _
    $region39: #{tpu_custom_call.1} parent=1 // pred_check_branch
      %73 = sbr.rel (0) target = $region41
    $region40: #{tpu_custom_call.1} parent=1 // pred_region
      _
    $region41: #{tpu_custom_call.1} parent=1 // pred_fallthru
      _
    // Predicated region
    $region42: #{tpu_custom_call.1} parent=1 // pred_check
      _
    $region43: #{tpu_custom_call.1} parent=1 // pred_check_branch
      %75 = sbr.rel (0) target = $region45
    $region44: #{tpu_custom_call.1} parent=1 // pred_region
      %s77 = ssub.s32 128, 128
      %78 = vsyncadd [#allocation9], %s77
      %s80 = sshll.u32 [#allocation10], 4
      %s81 = int_to_ptr.vmem [resolvable:$true] %s80
      %83 = dma.hbm_to_vmem [thread:$0]  %s10, 128, %s81, [#allocation9]
    $region45: #{tpu_custom_call.1} parent=1 // pred_fallthru
      _
    // Predicated region
    $region46: #{tpu_custom_call.1} parent=1 // pred_check
      _
    $region47: #{tpu_custom_call.1} parent=1 // pred_check_branch
      %85 = sbr.rel (0) target = $region49
    $region48: #{tpu_custom_call.1} parent=1 // pred_region
      %86 = dma.done [#allocation3], 512
    $region49: #{tpu_custom_call.1} parent=1 // pred_fallthru
      _
    // Predicated region
    $region50: #{tpu_custom_call.1} parent=1 // pred_check
      _
    $region51: #{tpu_custom_call.1} parent=1 // pred_check_branch
      %88 = sbr.rel (0) target = $region53
    $region52: #{tpu_custom_call.1} parent=1 // pred_region
      %89 = dma.done [#allocation6], 128
    $region53: #{tpu_custom_call.1} parent=1 // pred_fallthru
      _
    // Predicated region
    $region54: #{tpu_custom_call.1} parent=1 // pred_check
      _
    $region55: #{tpu_custom_call.1} parent=1 // pred_check_branch
      %91 = sbr.rel (0) target = $region57
    $region56: #{tpu_custom_call.1} parent=1 // pred_region
      %92 = dma.done [#allocation6], 128
    $region57: #{tpu_custom_call.1} parent=1 // pred_fallthru
      _
    // Predicated region
    $region58: #{tpu_custom_call.1} parent=1 // pred_check
      _
    $region59: #{tpu_custom_call.1} parent=1 // pred_check_branch
      %94 = sbr.rel (0) target = $region61
    $region60: #{tpu_custom_call.1} parent=1 // pred_region
      %95 = dma.done [#allocation9], 128
    $region61: #{tpu_custom_call.1} parent=1 // pred_fallthru
      _
    // Predicated region
    $region62: #{tpu_custom_call.1} parent=1 // pred_check
      _
    $region63: #{tpu_custom_call.1} parent=1 // pred_check_branch
      %97 = sbr.rel (0) target = $region65
    $region64: #{tpu_custom_call.1} parent=1 // pred_region
      %98 = dma.done [#allocation9], 128
    $region65: #{tpu_custom_call.1} parent=1 // pred_fallthru
      _
    %v99 = vld [vmem:[#allocation2] sm:$0xff]
    %v100 = vld [vmem:[#allocation2 + $0x8] sm:$0xff]
    %v101 = vld [vmem:[#allocation2 + $0x10] sm:$0xff]
    %v102 = vld [vmem:[#allocation2 + $0x18] sm:$0xff]
    %v103 = vld [vmem:[%s1] sm:$0x1]
    %v104 = vld [vmem:[%s2] sm:$0x1]
    %v105 = vld [vmem:[%s3] sm:$0xff]
    %v107 = vlaneseq
    %v108 = vshrl.u32 %v107, 7
    %v109 = vsub.s32 0, %v108
    %v110 = vrot.slane %v103, %v109
    %vm112 = vcmask 261120
    %v114 = vsel %vm112, %v105, 0
    %116 = vmatprep.subr.mxu0 0.0
    %117 = vmatpush1.msra.mxu0 %v99
    %118 = vmatprep.subr.mxu0 0.0
    %119 = vmatpush1.msra.mxu0 %v100
    %120 = vmatprep.subr.mxu0 0.0
    %121 = vmatpush1.msra.mxu0 %v101
    %122 = vmatprep.subr.mxu0 0.0
    %123 = vmatpush1.msra.mxu0 %v102
    %124 = vmatprep.subr.mxu0 0.0
    %125 = vmatpush1.msra.mxu0 0.0
    %126 = vmatprep.subr.mxu0 0.0
    %127 = vmatpush1.msra.mxu0 0.0
    %128 = vmatprep.subr.mxu0 0.0
    %129 = vmatpush1.msra.mxu0 0.0
    %130 = vmatprep.subr.mxu0 0.0
    %131 = vmatpush1.msra.mxu0 0.0
    %132 = vmatprep.subr.mxu0 0.0
    %133 = vmatpush1.msra.mxu0 0.0
    %134 = vmatprep.subr.mxu0 0.0
    %135 = vmatpush1.msra.mxu0 0.0
    %136 = vmatprep.subr.mxu0 0.0
    %137 = vmatpush1.msra.mxu0 0.0
    %138 = vmatprep.subr.mxu0 0.0
    %139 = vmatpush1.msra.mxu0 0.0
    %140 = vmatprep.subr.mxu0 0.0
    %141 = vmatpush1.msra.mxu0 0.0
    %142 = vmatprep.subr.mxu0 0.0
    %143 = vmatpush1.msra.mxu0 0.0
    %144 = vmatprep.subr.mxu0 0.0
    %145 = vmatpush1.msra.mxu0 0.0
    %146 = vmatprep.subr.mxu0 0.0
    %147 = vmatpush1.msra.mxu0 0.0
    %148 = vmatprep.subr.mxu0 0.0
    %149 = vmatpush1.msra.mxu0 0.0
    %150 = vmatprep.subr.mxu0 0.0
    %151 = vmatpush1.msra.mxu0 0.0
    %152 = vmatprep.subr.mxu0 0.0
    %153 = vmatpush1.msra.mxu0 0.0
    %154 = vmatprep.subr.mxu0 0.0
    %155 = vmatpush1.msra.mxu0 0.0
    %156 = vmatprep.subr.mxu0 0.0
    %157 = vmatpush1.msra.mxu0 0.0
    %158 = vmatprep.subr.mxu0 0.0
    %159 = vmatpush1.msra.mxu0 0.0
    %160 = vmatprep.subr.mxu0 0.0
    %161 = vmatpush1.msra.mxu0 0.0
    %162 = vmatprep.subr.mxu0 0.0
    %163 = vmatpush1.msra.mxu0 0.0
    %164 = vmatprep.subr.mxu0 0.0
    %165 = vmatpush1.msra.mxu0 0.0
    %166 = vmatprep.subr.mxu0 0.0
    %167 = vmatpush1.msra.mxu0 0.0
    %168 = vmatprep.subr.mxu0 0.0
    %169 = vmatpush1.msra.mxu0 0.0
    %170 = vmatprep.subr.mxu0 0.0
    %171 = vmatpush1.msra.mxu0 0.0
    %172 = vmatprep.subr.mxu0 0.0
    %173 = vmatpush1.msra.mxu0 0.0
    %174 = vmatprep.subr.mxu0 0.0
    %175 = vmatpush1.msra.mxu0 0.0
    %176 = vmatprep.subr.mxu0 0.0
    %177 = vmatpush1.msra.mxu0 0.0
    %178 = vmatprep.subr.mxu0 0.0
    %179 = vmatpush1.msra.mxu0 0.0
    %180 = vmatprep.mubr.f32.mxu0 0.0
    %181 = vmatmul.mubr.f32.gmra.mrb[0].mxu0 %v114
    %v182 = vpop.f32.mrb[0].mxu0
    %v183 = vadd.f32 %v110, %v182
    %v184 = vpop.f32.mrb[0].mxu0
    %185 = vdwg.mxu0
    %v186 = vtanh.pop %v183
    %v188 = vlaneseq
    %v189 = vshrl.u32 %v188, 7
    %v190 = vsub.s32 0, %v189
    %v191 = vrot.slane %v104, %v190
    %v193 = vmul.f32 %v186, %v191
    %v194 = vsel %vm112, %v193, 0.0
    %195 = vadd.xlane.f32.xlu0 %v194
    %v196 = vpop.xlane.xlu0 %195
    %v197 = vld [vmem:[#allocation5] sm:$0xff]
    %v199 = vsel %vm112, %v197, 0
    %201 = vmatprep.subr.mxu0 0.0
    %202 = vmatpush1.msra.mxu0 %v99
    %203 = vmatprep.subr.mxu0 0.0
    %204 = vmatpush1.msra.mxu0 %v100
    %205 = vmatprep.subr.mxu0 0.0
    %206 = vmatpush1.msra.mxu0 %v101
    %207 = vmatprep.subr.mxu0 0.0
    %208 = vmatpush1.msra.mxu0 %v102
    %209 = vmatprep.subr.mxu0 0.0
    %210 = vmatpush1.msra.mxu0 0.0
    %211 = vmatprep.subr.mxu0 0.0
    %212 = vmatpush1.msra.mxu0 0.0
    %213 = vmatprep.subr.mxu0 0.0
    %214 = vmatpush1.msra.mxu0 0.0
    %215 = vmatprep.subr.mxu0 0.0
    %216 = vmatpush1.msra.mxu0 0.0
    %217 = vmatprep.subr.mxu0 0.0
    %218 = vmatpush1.msra.mxu0 0.0
    %219 = vmatprep.subr.mxu0 0.0
    %220 = vmatpush1.msra.mxu0 0.0
    %221 = vmatprep.subr.mxu0 0.0
    %222 = vmatpush1.msra.mxu0 0.0
    %223 = vmatprep.subr.mxu0 0.0
    %224 = vmatpush1.msra.mxu0 0.0
    %225 = vmatprep.subr.mxu0 0.0
    %226 = vmatpush1.msra.mxu0 0.0
    %227 = vmatprep.subr.mxu0 0.0
    %228 = vmatpush1.msra.mxu0 0.0
    %229 = vmatprep.subr.mxu0 0.0
    %230 = vmatpush1.msra.mxu0 0.0
    %231 = vmatprep.subr.mxu0 0.0
    %232 = vmatpush1.msra.mxu0 0.0
    %233 = vmatprep.subr.mxu0 0.0
    %234 = vmatpush1.msra.mxu0 0.0
    %235 = vmatprep.subr.mxu0 0.0
    %236 = vmatpush1.msra.mxu0 0.0
    %237 = vmatprep.subr.mxu0 0.0
    %238 = vmatpush1.msra.mxu0 0.0
    %239 = vmatprep.subr.mxu0 0.0
    %240 = vmatpush1.msra.mxu0 0.0
    %241 = vmatprep.subr.mxu0 0.0
    %242 = vmatpush1.msra.mxu0 0.0
    %243 = vmatprep.subr.mxu0 0.0
    %244 = vmatpush1.msra.mxu0 0.0
    %245 = vmatprep.subr.mxu0 0.0
    %246 = vmatpush1.msra.mxu0 0.0
    %247 = vmatprep.subr.mxu0 0.0
    %248 = vmatpush1.msra.mxu0 0.0
    %249 = vmatprep.subr.mxu0 0.0
    %250 = vmatpush1.msra.mxu0 0.0
    %251 = vmatprep.subr.mxu0 0.0
    %252 = vmatpush1.msra.mxu0 0.0
    %253 = vmatprep.subr.mxu0 0.0
    %254 = vmatpush1.msra.mxu0 0.0
    %255 = vmatprep.subr.mxu0 0.0
    %256 = vmatpush1.msra.mxu0 0.0
    %257 = vmatprep.subr.mxu0 0.0
    %258 = vmatpush1.msra.mxu0 0.0
    %259 = vmatprep.subr.mxu0 0.0
    %260 = vmatpush1.msra.mxu0 0.0
    %261 = vmatprep.subr.mxu0 0.0
    %262 = vmatpush1.msra.mxu0 0.0
    %263 = vmatprep.subr.mxu0 0.0
    %264 = vmatpush1.msra.mxu0 0.0
    %265 = vmatprep.mubr.f32.mxu0 0.0
    %266 = vmatmul.mubr.f32.gmra.mrb[0].mxu0 %v199
    %v267 = vpop.f32.mrb[0].mxu0
    %v268 = vadd.f32 %v110, %v267
    %v269 = vpop.f32.mrb[0].mxu0
    %270 = vdwg.mxu0
    %v271 = vtanh.pop %v268
    %v272 = vmul.f32 %v271, %v191
    %v273 = vsel %vm112, %v272, 0.0
    %274 = vadd.xlane.f32.xlu0 %v273
    %v275 = vpop.xlane.xlu0 %274
    %v276 = vld [vmem:[%s5] sm:$0xff]
    %v278 = vsel %vm112, %v276, 0
    %280 = vmatprep.subr.mxu0 0.0
    %281 = vmatpush1.msra.mxu0 %v99
    %282 = vmatprep.subr.mxu0 0.0
    %283 = vmatpush1.msra.mxu0 %v100
    %284 = vmatprep.subr.mxu0 0.0
    %285 = vmatpush1.msra.mxu0 %v101
    %286 = vmatprep.subr.mxu0 0.0
    %287 = vmatpush1.msra.mxu0 %v102
    %288 = vmatprep.subr.mxu0 0.0
    %289 = vmatpush1.msra.mxu0 0.0
    %290 = vmatprep.subr.mxu0 0.0
    %291 = vmatpush1.msra.mxu0 0.0
    %292 = vmatprep.subr.mxu0 0.0
    %293 = vmatpush1.msra.mxu0 0.0
    %294 = vmatprep.subr.mxu0 0.0
    %295 = vmatpush1.msra.mxu0 0.0
    %296 = vmatprep.subr.mxu0 0.0
    %297 = vmatpush1.msra.mxu0 0.0
    %298 = vmatprep.subr.mxu0 0.0
    %299 = vmatpush1.msra.mxu0 0.0
    %300 = vmatprep.subr.mxu0 0.0
    %301 = vmatpush1.msra.mxu0 0.0
    %302 = vmatprep.subr.mxu0 0.0
    %303 = vmatpush1.msra.mxu0 0.0
    %304 = vmatprep.subr.mxu0 0.0
    %305 = vmatpush1.msra.mxu0 0.0
    %306 = vmatprep.subr.mxu0 0.0
    %307 = vmatpush1.msra.mxu0 0.0
    %308 = vmatprep.subr.mxu0 0.0
    %309 = vmatpush1.msra.mxu0 0.0
    %310 = vmatprep.subr.mxu0 0.0
    %311 = vmatpush1.msra.mxu0 0.0
    %312 = vmatprep.subr.mxu0 0.0
    %313 = vmatpush1.msra.mxu0 0.0
    %314 = vmatprep.subr.mxu0 0.0
    %315 = vmatpush1.msra.mxu0 0.0
    %316 = vmatprep.subr.mxu0 0.0
    %317 = vmatpush1.msra.mxu0 0.0
    %318 = vmatprep.subr.mxu0 0.0
    %319 = vmatpush1.msra.mxu0 0.0
    %320 = vmatprep.subr.mxu0 0.0
    %321 = vmatpush1.msra.mxu0 0.0
    %322 = vmatprep.subr.mxu0 0.0
    %323 = vmatpush1.msra.mxu0 0.0
    %324 = vmatprep.subr.mxu0 0.0
    %325 = vmatpush1.msra.mxu0 0.0
    %326 = vmatprep.subr.mxu0 0.0
    %327 = vmatpush1.msra.mxu0 0.0
    %328 = vmatprep.subr.mxu0 0.0
    %329 = vmatpush1.msra.mxu0 0.0
    %330 = vmatprep.subr.mxu0 0.0
    %331 = vmatpush1.msra.mxu0 0.0
    %332 = vmatprep.subr.mxu0 0.0
    %333 = vmatpush1.msra.mxu0 0.0
    %334 = vmatprep.subr.mxu0 0.0
    %335 = vmatpush1.msra.mxu0 0.0
    %336 = vmatprep.subr.mxu0 0.0
    %337 = vmatpush1.msra.mxu0 0.0
    %338 = vmatprep.subr.mxu0 0.0
    %339 = vmatpush1.msra.mxu0 0.0
    %340 = vmatprep.subr.mxu0 0.0
    %341 = vmatpush1.msra.mxu0 0.0
    %342 = vmatprep.subr.mxu0 0.0
    %343 = vmatpush1.msra.mxu0 0.0
    %344 = vmatprep.mubr.f32.mxu0 0.0
    %345 = vmatmul.mubr.f32.gmra.mrb[0].mxu0 %v278
    %v346 = vpop.f32.mrb[0].mxu0
    %v347 = vadd.f32 %v110, %v346
    %v348 = vpop.f32.mrb[0].mxu0
    %349 = vdwg.mxu0
    %v350 = vtanh.pop %v347
    %v351 = vmul.f32 %v350, %v191
    %v352 = vsel %vm112, %v351, 0.0
    %353 = vadd.xlane.f32.xlu0 %v352
    %v354 = vpop.xlane.xlu0 %353
    %v355 = vld [vmem:[#allocation7] sm:$0xff]
    %v357 = vsel %vm112, %v355, 0
    %359 = vmatprep.subr.mxu0 0.0
    %360 = vmatpush1.msra.mxu0 %v99
    %361 = vmatprep.subr.mxu0 0.0
    %362 = vmatpush1.msra.mxu0 %v100
    %363 = vmatprep.subr.mxu0 0.0
    %364 = vmatpush1.msra.mxu0 %v101
    %365 = vmatprep.subr.mxu0 0.0
    %366 = vmatpush1.msra.mxu0 %v102
    %367 = vmatprep.subr.mxu0 0.0
    %368 = vmatpush1.msra.mxu0 0.0
    %369 = vmatprep.subr.mxu0 0.0
    %370 = vmatpush1.msra.mxu0 0.0
    %371 = vmatprep.subr.mxu0 0.0
    %372 = vmatpush1.msra.mxu0 0.0
    %373 = vmatprep.subr.mxu0 0.0
    %374 = vmatpush1.msra.mxu0 0.0
    %375 = vmatprep.subr.mxu0 0.0
    %376 = vmatpush1.msra.mxu0 0.0
    %377 = vmatprep.subr.mxu0 0.0
    %378 = vmatpush1.msra.mxu0 0.0
    %379 = vmatprep.subr.mxu0 0.0
    %380 = vmatpush1.msra.mxu0 0.0
    %381 = vmatprep.subr.mxu0 0.0
    %382 = vmatpush1.msra.mxu0 0.0
    %383 = vmatprep.subr.mxu0 0.0
    %384 = vmatpush1.msra.mxu0 0.0
    %385 = vmatprep.subr.mxu0 0.0
    %386 = vmatpush1.msra.mxu0 0.0
    %387 = vmatprep.subr.mxu0 0.0
    %388 = vmatpush1.msra.mxu0 0.0
    %389 = vmatprep.subr.mxu0 0.0
    %390 = vmatpush1.msra.mxu0 0.0
    %391 = vmatprep.subr.mxu0 0.0
    %392 = vmatpush1.msra.mxu0 0.0
    %393 = vmatprep.subr.mxu0 0.0
    %394 = vmatpush1.msra.mxu0 0.0
    %395 = vmatprep.subr.mxu0 0.0
    %396 = vmatpush1.msra.mxu0 0.0
    %397 = vmatprep.subr.mxu0 0.0
    %398 = vmatpush1.msra.mxu0 0.0
    %399 = vmatprep.subr.mxu0 0.0
    %400 = vmatpush1.msra.mxu0 0.0
    %401 = vmatprep.subr.mxu0 0.0
    %402 = vmatpush1.msra.mxu0 0.0
    %403 = vmatprep.subr.mxu0 0.0
    %404 = vmatpush1.msra.mxu0 0.0
    %405 = vmatprep.subr.mxu0 0.0
    %406 = vmatpush1.msra.mxu0 0.0
    %407 = vmatprep.subr.mxu0 0.0
    %408 = vmatpush1.msra.mxu0 0.0
    %409 = vmatprep.subr.mxu0 0.0
    %410 = vmatpush1.msra.mxu0 0.0
    %411 = vmatprep.subr.mxu0 0.0
    %412 = vmatpush1.msra.mxu0 0.0
    %413 = vmatprep.subr.mxu0 0.0
    %414 = vmatpush1.msra.mxu0 0.0
    %415 = vmatprep.subr.mxu0 0.0
    %416 = vmatpush1.msra.mxu0 0.0
    %417 = vmatprep.subr.mxu0 0.0
    %418 = vmatpush1.msra.mxu0 0.0
    %419 = vmatprep.subr.mxu0 0.0
    %420 = vmatpush1.msra.mxu0 0.0
    %421 = vmatprep.subr.mxu0 0.0
    %422 = vmatpush1.msra.mxu0 0.0
    %423 = vmatprep.mubr.f32.mxu0 0.0
    %424 = vmatmul.mubr.f32.gmra.mrb[0].mxu0 %v357
    %v425 = vpop.f32.mrb[0].mxu0
    %v426 = vadd.f32 %v110, %v425
    %v427 = vpop.f32.mrb[0].mxu0
    %428 = vdwg.mxu0
    %v429 = vtanh.pop %v426
    %v430 = vmul.f32 %v429, %v191
    %v431 = vsel %vm112, %v430, 0.0
    %432 = vadd.xlane.f32.xlu0 %v431
    %v433 = vpop.xlane.xlu0 %432
    %v434 = vld [vmem:[%s7] sm:$0xff]
    %v436 = vsel %vm112, %v434, 0
    %438 = vmatprep.subr.mxu0 0.0
    %439 = vmatpush1.msra.mxu0 %v99
    %440 = vmatprep.subr.mxu0 0.0
    %441 = vmatpush1.msra.mxu0 %v100
    %442 = vmatprep.subr.mxu0 0.0
    %443 = vmatpush1.msra.mxu0 %v101
    %444 = vmatprep.subr.mxu0 0.0
    %445 = vmatpush1.msra.mxu0 %v102
    %446 = vmatprep.subr.mxu0 0.0
    %447 = vmatpush1.msra.mxu0 0.0
    %448 = vmatprep.subr.mxu0 0.0
    %449 = vmatpush1.msra.mxu0 0.0
    %450 = vmatprep.subr.mxu0 0.0
    %451 = vmatpush1.msra.mxu0 0.0
    %452 = vmatprep.subr.mxu0 0.0
    %453 = vmatpush1.msra.mxu0 0.0
    %454 = vmatprep.subr.mxu0 0.0
    %455 = vmatpush1.msra.mxu0 0.0
    %456 = vmatprep.subr.mxu0 0.0
    %457 = vmatpush1.msra.mxu0 0.0
    %458 = vmatprep.subr.mxu0 0.0
    %459 = vmatpush1.msra.mxu0 0.0
    %460 = vmatprep.subr.mxu0 0.0
    %461 = vmatpush1.msra.mxu0 0.0
    %462 = vmatprep.subr.mxu0 0.0
    %463 = vmatpush1.msra.mxu0 0.0
    %464 = vmatprep.subr.mxu0 0.0
    %465 = vmatpush1.msra.mxu0 0.0
    %466 = vmatprep.subr.mxu0 0.0
    %467 = vmatpush1.msra.mxu0 0.0
    %468 = vmatprep.subr.mxu0 0.0
    %469 = vmatpush1.msra.mxu0 0.0
    %470 = vmatprep.subr.mxu0 0.0
    %471 = vmatpush1.msra.mxu0 0.0
    %472 = vmatprep.subr.mxu0 0.0
    %473 = vmatpush1.msra.mxu0 0.0
    %474 = vmatprep.subr.mxu0 0.0
    %475 = vmatpush1.msra.mxu0 0.0
    %476 = vmatprep.subr.mxu0 0.0
    %477 = vmatpush1.msra.mxu0 0.0
    %478 = vmatprep.subr.mxu0 0.0
    %479 = vmatpush1.msra.mxu0 0.0
    %480 = vmatprep.subr.mxu0 0.0
    %481 = vmatpush1.msra.mxu0 0.0
    %482 = vmatprep.subr.mxu0 0.0
    %483 = vmatpush1.msra.mxu0 0.0
    %484 = vmatprep.subr.mxu0 0.0
    %485 = vmatpush1.msra.mxu0 0.0
    %486 = vmatprep.subr.mxu0 0.0
    %487 = vmatpush1.msra.mxu0 0.0
    %488 = vmatprep.subr.mxu0 0.0
    %489 = vmatpush1.msra.mxu0 0.0
    %490 = vmatprep.subr.mxu0 0.0
    %491 = vmatpush1.msra.mxu0 0.0
    %492 = vmatprep.subr.mxu0 0.0
    %493 = vmatpush1.msra.mxu0 0.0
    %494 = vmatprep.subr.mxu0 0.0
    %495 = vmatpush1.msra.mxu0 0.0
    %496 = vmatprep.subr.mxu0 0.0
    %497 = vmatpush1.msra.mxu0 0.0
    %498 = vmatprep.subr.mxu0 0.0
    %499 = vmatpush1.msra.mxu0 0.0
    %500 = vmatprep.subr.mxu0 0.0
    %501 = vmatpush1.msra.mxu0 0.0
    %502 = vmatprep.mubr.f32.mxu0 0.0
    %503 = vmatmul.mubr.f32.gmra.mrb[0].mxu0 %v436
    %v504 = vpop.f32.mrb[0].mxu0
    %v505 = vadd.f32 %v110, %v504
    %v506 = vpop.f32.mrb[0].mxu0
    %507 = vdwg.mxu0
    %v508 = vtanh.pop %v505
    %v509 = vmul.f32 %v508, %v191
    %v510 = vsel %vm112, %v509, 0.0
    %511 = vadd.xlane.f32.xlu0 %v510
    %v512 = vpop.xlane.xlu0 %511
    %v513 = vld [vmem:[#allocation8] sm:$0xff]
    %v515 = vsel %vm112, %v513, 0
    %517 = vmatprep.subr.mxu0 0.0
    %518 = vmatpush1.msra.mxu0 %v99
    %519 = vmatprep.subr.mxu0 0.0
    %520 = vmatpush1.msra.mxu0 %v100
    %521 = vmatprep.subr.mxu0 0.0
    %522 = vmatpush1.msra.mxu0 %v101
    %523 = vmatprep.subr.mxu0 0.0
    %524 = vmatpush1.msra.mxu0 %v102
    %525 = vmatprep.subr.mxu0 0.0
    %526 = vmatpush1.msra.mxu0 0.0
    %527 = vmatprep.subr.mxu0 0.0
    %528 = vmatpush1.msra.mxu0 0.0
    %529 = vmatprep.subr.mxu0 0.0
    %530 = vmatpush1.msra.mxu0 0.0
    %531 = vmatprep.subr.mxu0 0.0
    %532 = vmatpush1.msra.mxu0 0.0
    %533 = vmatprep.subr.mxu0 0.0
    %534 = vmatpush1.msra.mxu0 0.0
    %535 = vmatprep.subr.mxu0 0.0
    %536 = vmatpush1.msra.mxu0 0.0
    %537 = vmatprep.subr.mxu0 0.0
    %538 = vmatpush1.msra.mxu0 0.0
    %539 = vmatprep.subr.mxu0 0.0
    %540 = vmatpush1.msra.mxu0 0.0
    %541 = vmatprep.subr.mxu0 0.0
    %542 = vmatpush1.msra.mxu0 0.0
    %543 = vmatprep.subr.mxu0 0.0
    %544 = vmatpush1.msra.mxu0 0.0
    %545 = vmatprep.subr.mxu0 0.0
    %546 = vmatpush1.msra.mxu0 0.0
    %547 = vmatprep.subr.mxu0 0.0
    %548 = vmatpush1.msra.mxu0 0.0
    %549 = vmatprep.subr.mxu0 0.0
    %550 = vmatpush1.msra.mxu0 0.0
    %551 = vmatprep.subr.mxu0 0.0
    %552 = vmatpush1.msra.mxu0 0.0
    %553 = vmatprep.subr.mxu0 0.0
    %554 = vmatpush1.msra.mxu0 0.0
    %555 = vmatprep.subr.mxu0 0.0
    %556 = vmatpush1.msra.mxu0 0.0
    %557 = vmatprep.subr.mxu0 0.0
    %558 = vmatpush1.msra.mxu0 0.0
    %559 = vmatprep.subr.mxu0 0.0
    %560 = vmatpush1.msra.mxu0 0.0
    %561 = vmatprep.subr.mxu0 0.0
    %562 = vmatpush1.msra.mxu0 0.0
    %563 = vmatprep.subr.mxu0 0.0
    %564 = vmatpush1.msra.mxu0 0.0
    %565 = vmatprep.subr.mxu0 0.0
    %566 = vmatpush1.msra.mxu0 0.0
    %567 = vmatprep.subr.mxu0 0.0
    %568 = vmatpush1.msra.mxu0 0.0
    %569 = vmatprep.subr.mxu0 0.0
    %570 = vmatpush1.msra.mxu0 0.0
    %571 = vmatprep.subr.mxu0 0.0
    %572 = vmatpush1.msra.mxu0 0.0
    %573 = vmatprep.subr.mxu0 0.0
    %574 = vmatpush1.msra.mxu0 0.0
    %575 = vmatprep.subr.mxu0 0.0
    %576 = vmatpush1.msra.mxu0 0.0
    %577 = vmatprep.subr.mxu0 0.0
    %578 = vmatpush1.msra.mxu0 0.0
    %579 = vmatprep.subr.mxu0 0.0
    %580 = vmatpush1.msra.mxu0 0.0
    %581 = vmatprep.mubr.f32.mxu0 0.0
    %582 = vmatmul.mubr.f32.gmra.mrb[0].mxu0 %v515
    %v583 = vpop.f32.mrb[0].mxu0
    %v584 = vadd.f32 %v110, %v583
    %v585 = vpop.f32.mrb[0].mxu0
    %586 = vdwg.mxu0
    %v587 = vtanh.pop %v584
    %v588 = vmul.f32 %v587, %v191
    %v589 = vsel %vm112, %v588, 0.0
    %590 = vadd.xlane.f32.xlu0 %v589
    %v591 = vpop.xlane.xlu0 %590
    %v592 = vld [vmem:[%s9] sm:$0xff]
    %v594 = vsel %vm112, %v592, 0
    %596 = vmatprep.subr.mxu0 0.0
    %597 = vmatpush1.msra.mxu0 %v99
    %598 = vmatprep.subr.mxu0 0.0
    %599 = vmatpush1.msra.mxu0 %v100
    %600 = vmatprep.subr.mxu0 0.0
    %601 = vmatpush1.msra.mxu0 %v101
    %602 = vmatprep.subr.mxu0 0.0
    %603 = vmatpush1.msra.mxu0 %v102
    %604 = vmatprep.subr.mxu0 0.0
    %605 = vmatpush1.msra.mxu0 0.0
    %606 = vmatprep.subr.mxu0 0.0
    %607 = vmatpush1.msra.mxu0 0.0
    %608 = vmatprep.subr.mxu0 0.0
    %609 = vmatpush1.msra.mxu0 0.0
    %610 = vmatprep.subr.mxu0 0.0
    %611 = vmatpush1.msra.mxu0 0.0
    %612 = vmatprep.subr.mxu0 0.0
    %613 = vmatpush1.msra.mxu0 0.0
    %614 = vmatprep.subr.mxu0 0.0
    %615 = vmatpush1.msra.mxu0 0.0
    %616 = vmatprep.subr.mxu0 0.0
    %617 = vmatpush1.msra.mxu0 0.0
    %618 = vmatprep.subr.mxu0 0.0
    %619 = vmatpush1.msra.mxu0 0.0
    %620 = vmatprep.subr.mxu0 0.0
    %621 = vmatpush1.msra.mxu0 0.0
    %622 = vmatprep.subr.mxu0 0.0
    %623 = vmatpush1.msra.mxu0 0.0
    %624 = vmatprep.subr.mxu0 0.0
    %625 = vmatpush1.msra.mxu0 0.0
    %626 = vmatprep.subr.mxu0 0.0
    %627 = vmatpush1.msra.mxu0 0.0
    %628 = vmatprep.subr.mxu0 0.0
    %629 = vmatpush1.msra.mxu0 0.0
    %630 = vmatprep.subr.mxu0 0.0
    %631 = vmatpush1.msra.mxu0 0.0
    %632 = vmatprep.subr.mxu0 0.0
    %633 = vmatpush1.msra.mxu0 0.0
    %634 = vmatprep.subr.mxu0 0.0
    %635 = vmatpush1.msra.mxu0 0.0
    %636 = vmatprep.subr.mxu0 0.0
    %637 = vmatpush1.msra.mxu0 0.0
    %638 = vmatprep.subr.mxu0 0.0
    %639 = vmatpush1.msra.mxu0 0.0
    %640 = vmatprep.subr.mxu0 0.0
    %641 = vmatpush1.msra.mxu0 0.0
    %642 = vmatprep.subr.mxu0 0.0
    %643 = vmatpush1.msra.mxu0 0.0
    %644 = vmatprep.subr.mxu0 0.0
    %645 = vmatpush1.msra.mxu0 0.0
    %646 = vmatprep.subr.mxu0 0.0
    %647 = vmatpush1.msra.mxu0 0.0
    %648 = vmatprep.subr.mxu0 0.0
    %649 = vmatpush1.msra.mxu0 0.0
    %650 = vmatprep.subr.mxu0 0.0
    %651 = vmatpush1.msra.mxu0 0.0
    %652 = vmatprep.subr.mxu0 0.0
    %653 = vmatpush1.msra.mxu0 0.0
    %654 = vmatprep.subr.mxu0 0.0
    %655 = vmatpush1.msra.mxu0 0.0
    %656 = vmatprep.subr.mxu0 0.0
    %657 = vmatpush1.msra.mxu0 0.0
    %658 = vmatprep.subr.mxu0 0.0
    %659 = vmatpush1.msra.mxu0 0.0
    %660 = vmatprep.mubr.f32.mxu0 0.0
    %661 = vmatmul.mubr.f32.gmra.mrb[0].mxu0 %v594
    %v662 = vpop.f32.mrb[0].mxu0
    %v663 = vadd.f32 %v110, %v662
    %v664 = vpop.f32.mrb[0].mxu0
    %665 = vdwg.mxu0
    %v666 = vtanh.pop %v663
    %v667 = vmul.f32 %v666, %v191
    %v668 = vsel %vm112, %v667, 0.0
    %669 = vadd.xlane.f32.xlu0 %v668
    %v670 = vpop.xlane.xlu0 %669
    %v671 = vld [vmem:[#allocation10] sm:$0xff]
    %v673 = vsel %vm112, %v671, 0
    %675 = vmatprep.subr.mxu0 0.0
    %676 = vmatpush1.msra.mxu0 %v99
    %677 = vmatprep.subr.mxu0 0.0
    %678 = vmatpush1.msra.mxu0 %v100
    %679 = vmatprep.subr.mxu0 0.0
    %680 = vmatpush1.msra.mxu0 %v101
    %681 = vmatprep.subr.mxu0 0.0
    %682 = vmatpush1.msra.mxu0 %v102
    %683 = vmatprep.subr.mxu0 0.0
    %684 = vmatpush1.msra.mxu0 0.0
    %685 = vmatprep.subr.mxu0 0.0
    %686 = vmatpush1.msra.mxu0 0.0
    %687 = vmatprep.subr.mxu0 0.0
    %688 = vmatpush1.msra.mxu0 0.0
    %689 = vmatprep.subr.mxu0 0.0
    %690 = vmatpush1.msra.mxu0 0.0
    %691 = vmatprep.subr.mxu0 0.0
    %692 = vmatpush1.msra.mxu0 0.0
    %693 = vmatprep.subr.mxu0 0.0
    %694 = vmatpush1.msra.mxu0 0.0
    %695 = vmatprep.subr.mxu0 0.0
    %696 = vmatpush1.msra.mxu0 0.0
    %697 = vmatprep.subr.mxu0 0.0
    %698 = vmatpush1.msra.mxu0 0.0
    %699 = vmatprep.subr.mxu0 0.0
    %700 = vmatpush1.msra.mxu0 0.0
    %701 = vmatprep.subr.mxu0 0.0
    %702 = vmatpush1.msra.mxu0 0.0
    %703 = vmatprep.subr.mxu0 0.0
    %704 = vmatpush1.msra.mxu0 0.0
    %705 = vmatprep.subr.mxu0 0.0
    %706 = vmatpush1.msra.mxu0 0.0
    %707 = vmatprep.subr.mxu0 0.0
    %708 = vmatpush1.msra.mxu0 0.0
    %709 = vmatprep.subr.mxu0 0.0
    %710 = vmatpush1.msra.mxu0 0.0
    %711 = vmatprep.subr.mxu0 0.0
    %712 = vmatpush1.msra.mxu0 0.0
    %713 = vmatprep.subr.mxu0 0.0
    %714 = vmatpush1.msra.mxu0 0.0
    %715 = vmatprep.subr.mxu0 0.0
    %716 = vmatpush1.msra.mxu0 0.0
    %717 = vmatprep.subr.mxu0 0.0
    %718 = vmatpush1.msra.mxu0 0.0
    %719 = vmatprep.subr.mxu0 0.0
    %720 = vmatpush1.msra.mxu0 0.0
    %721 = vmatprep.subr.mxu0 0.0
    %722 = vmatpush1.msra.mxu0 0.0
    %723 = vmatprep.subr.mxu0 0.0
    %724 = vmatpush1.msra.mxu0 0.0
    %725 = vmatprep.subr.mxu0 0.0
    %726 = vmatpush1.msra.mxu0 0.0
    %727 = vmatprep.subr.mxu0 0.0
    %728 = vmatpush1.msra.mxu0 0.0
    %729 = vmatprep.subr.mxu0 0.0
    %730 = vmatpush1.msra.mxu0 0.0
    %731 = vmatprep.subr.mxu0 0.0
    %732 = vmatpush1.msra.mxu0 0.0
    %733 = vmatprep.subr.mxu0 0.0
    %734 = vmatpush1.msra.mxu0 0.0
    %735 = vmatprep.subr.mxu0 0.0
    %736 = vmatpush1.msra.mxu0 0.0
    %737 = vmatprep.subr.mxu0 0.0
    %738 = vmatpush1.msra.mxu0 0.0
    %739 = vmatprep.mubr.f32.mxu0 0.0
    %740 = vmatmul.mubr.f32.gmra.mrb[0].mxu0 %v673
    %v741 = vpop.f32.mrb[0].mxu0
    %v742 = vadd.f32 %v110, %v741
    %v743 = vpop.f32.mrb[0].mxu0
    %744 = vdwg.mxu0
    %v745 = vtanh.pop %v742
    %v746 = vmul.f32 %v745, %v191
    %v747 = vsel %vm112, %v746, 0.0
    %748 = vadd.xlane.f32.xlu0 %v747
    %v749 = vpop.xlane.xlu0 %748
    %v750 = vmax.f32 %v196, %v275
    %v751 = vmax.f32 %v750, %v354
    %v752 = vmax.f32 %v751, %v433
    %v753 = vmax.f32 %v752, %v512
    %v754 = vmax.f32 %v753, %v591
    %v755 = vmax.f32 %v754, %v670
    %v756 = vmax.f32 %v755, %v749
    %v757 = vsub.f32 %v196, %v756
    %v758 = vmul.f32 %v757, 1.442695
    %v759 = vpow.pop %v758
    %v760 = vsub.f32 %v275, %v756
    %v761 = vmul.f32 %v760, 1.442695
    %v762 = vpow.pop %v761
    %v763 = vsub.f32 %v354, %v756
    %v764 = vmul.f32 %v763, 1.442695
    %v765 = vpow.pop %v764
    %v766 = vsub.f32 %v433, %v756
    %v767 = vmul.f32 %v766, 1.442695
    %v768 = vpow.pop %v767
    %v769 = vsub.f32 %v512, %v756
    %v770 = vmul.f32 %v769, 1.442695
    %v771 = vpow.pop %v770
    %v772 = vsub.f32 %v591, %v756
    %v773 = vmul.f32 %v772, 1.442695
    %v774 = vpow.pop %v773
    %v775 = vsub.f32 %v670, %v756
    %v776 = vmul.f32 %v775, 1.442695
    %v777 = vpow.pop %v776
    %v778 = vsub.f32 %v749, %v756
    %v779 = vmul.f32 %v778, 1.442695
    %v780 = vpow.pop %v779
    %v781 = vadd.f32 %v759, %v762
    %v782 = vadd.f32 %v781, %v765
    %v783 = vadd.f32 %v782, %v768
    %v784 = vadd.f32 %v783, %v771
    %v785 = vadd.f32 %v784, %v774
    %v786 = vadd.f32 %v785, %v777
    %v787 = vadd.f32 %v786, %v780
    %v788 = vrcp.pop %v787
    %v789 = vmul.f32 %v759, %v788
    %v790 = vmul.f32 %v789, %v105
    %v791 = vmul.f32 %v762, %v788
    %v792 = vmul.f32 %v791, %v197
    %v793 = vadd.f32 %v790, %v792
    %v794 = vmul.f32 %v765, %v788
    %v795 = vmul.f32 %v794, %v276
    %v796 = vadd.f32 %v793, %v795
    %v797 = vmul.f32 %v768, %v788
    %v798 = vmul.f32 %v797, %v355
    %v799 = vadd.f32 %v796, %v798
    %v800 = vmul.f32 %v771, %v788
    %v801 = vmul.f32 %v800, %v434
    %v802 = vadd.f32 %v799, %v801
    %v803 = vmul.f32 %v774, %v788
    %v804 = vmul.f32 %v803, %v513
    %v805 = vadd.f32 %v802, %v804
    %v806 = vmul.f32 %v777, %v788
    %v807 = vmul.f32 %v806, %v592
    %v808 = vadd.f32 %v805, %v807
    %v809 = vmul.f32 %v780, %v788
    %v810 = vmul.f32 %v809, %v671
    %v811 = vadd.f32 %v808, %v810
    %812 = vst.msk [vmem:[#allocation11] sm:$0xff] %vm112, %v811
    // Predicated region
    $region66: #{tpu_custom_call.1} parent=1 // pred_check
      _
    $region67: #{tpu_custom_call.1} parent=1 // pred_check_branch
      %814 = sbr.rel (0) target = $region69
    $region68: #{tpu_custom_call.1} parent=1 // pred_region
      %s816 = ssub.s32 128, 128
      %817 = vsyncadd [#allocation4], %s816
      %s819 = sshll.u32 [#allocation11], 4
      %s820 = int_to_ptr.vmem [resolvable:$true] %s819
      %822 = dma.vmem_to_hbm [thread:$0]  %s820, 128, %s11, [#allocation4]
    $region69: #{tpu_custom_call.1} parent=1 // pred_fallthru
      _
    // Predicated region
    $region70: #{tpu_custom_call.1} parent=1 // pred_check
      _
    $region71: #{tpu_custom_call.1} parent=1 // pred_check_branch
      %824 = sbr.rel (0) target = $region73
    $region72: #{tpu_custom_call.1} parent=1 // pred_region
      %825 = dma.done [#allocation4], 128
    $region73: #{tpu_custom_call.1} parent=1 // pred_fallthru
      _
    %826 = vsyncpa [#allocation3], 1
    %827 = vsyncpa [#allocation6], 1
    %828 = vsyncpa [#allocation9], 1
    %829 = vsyncpa [#allocation4], 1

</llo_original>
